<compile_context>
chip_gen: v6e
topology: v6e:2x2x1
jax: 0.10.0
libtpu: 0.0.40
codegen_flags: <defaults>
</compile_context>

<pallas_src>
import jax
import jax.numpy as jnp
from jax.experimental import pallas as pl
from jax.experimental.pallas import tpu as pltpu


def _make_kernel(C, T, HW, has_mask, one_hot_target, need_pad_mask):
    # NOTE: Python-float constants only (jnp scalars here would become captured
    # constants in the kernel jaxpr and fail tracing).
    neg_inf = float("-inf")

    def kernel(*refs):
        if has_mask:
            logs_ref, tgt_ref, mask_ref, out_ref = refs
        else:
            logs_ref, tgt_ref, out_ref = refs

        x = logs_ref[...].astype(jnp.float32)                     # (1, C, T)

        # Background logit: aligned sublane-0 read, no XLU reduction.
        b0 = x[:, 0, :]                                           # (1, T)
        # Max foreground logit: iota-masked max over channels 1..C-1
        # (avoids an unaligned sublane-1 slice copy).
        c_id = jax.lax.broadcasted_iota(jnp.int32, (1, C, T), 1)
        b1 = jnp.max(jnp.where(c_id >= 1, x, neg_inf), axis=1)    # (1, T)

        if one_hot_target:
            # tgt_ref holds only the background channel of the one-hot target:
            #   argmax(one_hot, C) > 0  <=>  one_hot[:, 0] < 0.5
            y0 = tgt_ref[...].astype(jnp.float32)[:, 0, :]        # (1, T)
            is_fg = y0 < 0.5
        else:
            # Soft-label fallback: argmax(y, C) > 0 with first-max tie-breaking
            #   <=>  max(y[1:]) > y[0]
            y = tgt_ref[...].astype(jnp.float32)                  # (1, C, T)
            y0 = y[:, 0, :]
            y1 = jnp.max(jnp.where(c_id >= 1, y, neg_inf), axis=1)
            is_fg = y1 > y0

        # 2-class cross entropy in BCE-with-logits (softplus) form:
        #   z = b1 - b0;  loss = softplus(z) - z * is_fg
        z = b1 - b0
        loss = jnp.maximum(z, 0.0) + jnp.log1p(jnp.exp(-jnp.abs(z)))
        loss = loss - jnp.where(is_fg, z, 0.0)                    # (1, T)

        if has_mask:
            loss = loss * mask_ref[...].astype(jnp.float32)[:, 0, :]

        def _write(vals):
            out_ref[...] = jnp.sum(vals, axis=-1, keepdims=True).reshape(1, 1, 1)

        if need_pad_mask:
            # Only the last pixel block is partial; keep its padded lanes out of
            # the sum via a select (NOT a multiply: padded lanes may hold NaN).
            p = pl.program_id(1)
            last = pl.num_programs(1) - 1

            @pl.when(p == last)
            def _():
                lane = jax.lax.broadcasted_iota(jnp.int32, (1, T), 1)
                _write(jnp.where(p * T + lane < HW, loss, 0.0))

            @pl.when(p != last)
            def _():
                _write(loss)
        else:
            _write(loss)

    return kernel


def bin_cross_entropy_pallas(logs, yb_oh, mask=None, *, one_hot_target=True):
    """logs, yb_oh: (N, C, H, W); mask: (N, 1, H, W) or None. Returns scalar f32.

    Narrow HBM dtypes (bf16 logits/targets, int8/bool mask) are accepted and
    upcast to f32 inside the kernel only.
    """
    assert logs.shape == yb_oh.shape
    N, C, H, W = logs.shape
    assert C >= 2, "need a background channel and at least one foreground channel"
    HW = H * W
    P = N * HW

    # NCHW -> (N, C, H*W): free reshape, NO transpose. Pixels on the lane axis.
    logs3 = logs.reshape(N, C, HW)

    if one_hot_target:
        # Only the background channel is needed. Slicing here keeps the target's
        # BlockSpec (1, 1, T) trivially legal and cuts (C-1)/C of the target HBM
        # bytes read by the kernel.
        tgt3 = yb_oh[:, 0:1].reshape(N, 1, HW)
    else:
        tgt3 = yb_oh.reshape(N, C, HW)
    TC = tgt3.shape[1]

    # Pixel tile: multiple of 128, <= ~2 MiB per logits block, <= 32768 lanes
    # (double-buffered blocks stay far below even v7x's 64 MiB VMEM).
    bpe = jnp.dtype(logs.dtype).itemsize
    t_cap = max(128, min(32768, ((2 * 1024 * 1024) // (bpe * C)) // 128 * 128))
    # Ensure >= ~4 total grid steps so both v7x TensorCores get work even for
    # small N / small images (harmless on single-TC v5e/v6e).
    want_p = max(1, pl.cdiv(4, N))
    t_want = ((pl.cdiv(HW, want_p) + 127) // 128) * 128
    T = min(t_cap, t_want)
    if T >= HW:
        T = HW                      # full extent (need not be a multiple of 128)
    GP = pl.cdiv(HW, T)
    need_pad_mask = (HW % T) != 0

    has_mask = mask is not None
    in_specs = [
        pl.BlockSpec((1, C, T), lambda n, p: (n, 0, p)),
        pl.BlockSpec((1, TC, T), lambda n, p: (n, 0, p)),
    ]
    operands = [logs3, tgt3]
    if has_mask:
        m = mask
        if m.dtype == jnp.bool_:
            m = m.astype(jnp.int8)   # still 1 byte/elem; Mosaic-friendly load
        mask3 = m[:, 0:1].reshape(N, 1, HW)
        in_specs.append(pl.BlockSpec((1, 1, T), lambda n, p: (n, 0, p)))
        operands.append(mask3)

    kernel = _make_kernel(C, T, HW, has_mask, one_hot_target, need_pad_mask)

    partials = pl.pallas_call(
        kernel,
        out_shape=jax.ShapeDtypeStruct((N * GP, 1, 1), jnp.float32),
        grid_spec=pltpu.PrefetchScalarGridSpec(
            num_scalar_prefetch=0,
            grid=(N, GP),
            in_specs=in_specs,
            out_specs=pl.BlockSpec((1, 1, 1), lambda n, p: (n * GP + p, 0, 0)),
        ),
        compiler_params=pltpu.CompilerParams(
            dimension_semantics=("parallel", "parallel"),
            vmem_limit_bytes=32 * 1024 * 1024,
        ),
    )(*operands)

    # Mean over all N*H*W pixels (mask only zeroes terms, matching torch).
    return jnp.sum(partials) / jnp.float32(P)


def _reference(logs, yb_oh, mask=None):
    # Plain-JAX reference mirroring the torch module.
    yb_int = jnp.argmax(yb_oh, axis=1)                             # (N,H,W)
    yb_bin = (yb_int > 0).astype(jnp.int32)
    fg = jnp.max(logs[:, 1:], axis=1, keepdims=True)               # (N,1,H,W)
    logs_bin = jnp.concatenate([logs[:, :1], fg], axis=1)          # (N,2,H,W)
    logp = jax.nn.log_softmax(logs_bin, axis=1)
    l = -jnp.take_along_axis(logp, yb_bin[:, None], axis=1)[:, 0]  # (N,H,W)
    if mask is not None:
        l = l * mask[:, 0].astype(l.dtype)
    return jnp.mean(l)


if __name__ == "__main__":
    key = jax.random.PRNGKey(0)
    k1, k2, k3 = jax.random.split(key, 3)

    N, C, H, W = 2, 4, 16, 16
    logs = jax.random.normal(k1, (N, C, H, W), jnp.float32)
    labels = jax.random.randint(k2, (N, H, W), 0, C)
    yb_oh = jnp.transpose(jax.nn.one_hot(labels, C, dtype=jnp.float32), (0, 3, 1, 2))
    mask = (jax.random.uniform(k3, (N, 1, H, W)) > 0.3).astype(jnp.float32)

    # 1) with mask, one-hot fast path
    out = bin_cross_entropy_pallas(logs, yb_oh, mask)
    jax.block_until_ready(out)
    ref = _reference(logs, yb_oh, mask)
    assert jnp.allclose(out, ref, rtol=1e-5, atol=1e-5), (out, ref)

    # 2) without mask (separate no-mask kernel variant)
    out2 = bin_cross_entropy_pallas(logs, yb_oh, None)
    jax.block_until_ready(out2)
    ref2 = _reference(logs, yb_oh, None)
    assert jnp.allclose(out2, ref2, rtol=1e-5, atol=1e-5), (out2, ref2)

    # 3) soft-label fallback path (full-C target read, in-kernel argmax)
    out3 = bin_cross_entropy_pallas(logs, yb_oh, mask, one_hot_target=False)
    jax.block_until_ready(out3)
    assert jnp.allclose(out3, ref, rtol=1e-5, atol=1e-5), (out3, ref)

    # 4) pixel count not a multiple of the 128-lane tile -> tail-masked last block
    Hs, Ws = 12, 12
    logs_s = jax.random.normal(k1, (N, C, Hs, Ws), jnp.float32)
    labels_s = jax.random.randint(k2, (N, Hs, Ws), 0, C)
    yoh_s = jnp.transpose(jax.nn.one_hot(labels_s, C, dtype=jnp.float32), (0, 3, 1, 2))
    out4 = bin_cross_entropy_pallas(logs_s, yoh_s, None)
    jax.block_until_ready(out4)
    ref4 = _reference(logs_s, yoh_s, None)
    assert jnp.allclose(out4, ref4, rtol=1e-5, atol=1e-5), (out4, ref4)

    # 5) narrow HBM dtypes: bf16 logits / one-hot target, int8 mask
    logs_bf = logs.astype(jnp.bfloat16)
    yoh_bf = yb_oh.astype(jnp.bfloat16)
    mask_i8 = mask.astype(jnp.int8)
    out5 = bin_cross_entropy_pallas(logs_bf, yoh_bf, mask_i8)
    jax.block_until_ready(out5)
    ref5 = _reference(logs_bf.astype(jnp.float32), yoh_bf.astype(jnp.float32),
                      mask_i8.astype(jnp.float32))
    assert jnp.allclose(out5, ref5, rtol=1e-4, atol=1e-4), (out5, ref5)

    print("KERNEL_OK")
</pallas_src>

<mosaic_0001>
module attributes {stable_mosaic.version = 11 : i64} {
  func.func @kernel(%arg0: i32, %arg1: i32, %arg2: memref<1x4x128xf32, #tpu.memory_space<vmem>>, %arg3: memref<1x1x128xf32, #tpu.memory_space<vmem>>, %arg4: memref<1x1x128xf32, #tpu.memory_space<vmem>>, %arg5: memref<1x1x1xf32, #tpu.memory_space<vmem>>) attributes {dimension_semantics = [#tpu.dimension_semantics<parallel>, #tpu.dimension_semantics<parallel>], iteration_bounds = array<i64: 2, 2>, scalar_prefetch = 0 : i64, scratch_operands = 0 : i64, tpu.core_type = #tpu.core_type<tc>, window_params = [{transform_indices = @transform_0, window_bounds = array<i64: 1, 4, 128>}, {transform_indices = @transform_1, window_bounds = array<i64: 1, 1, 128>}, {transform_indices = @transform_2, window_bounds = array<i64: 1, 1, 128>}, {transform_indices = @transform_3, window_bounds = array<i64: 1, 1, 1>}]} {
    %c0 = arith.constant 0 : index
    %c0_0 = arith.constant 0 : index
    %c0_1 = arith.constant 0 : index
    %0 = vector.load %arg2[%c0, %c0_0, %c0_1] : memref<1x4x128xf32, #tpu.memory_space<vmem>>, vector<1x4x128xf32>
    %1 = vector.extract_strided_slice %0 {offsets = [0, 0, 0], sizes = [1, 1, 128], strides = [1, 1, 1]} : vector<1x4x128xf32> to vector<1x1x128xf32>
    %2 = vector.shape_cast %1 : vector<1x1x128xf32> to vector<1x128xf32>
    %3 = tpu.iota {dimensions = array<i32: 1>} : vector<1x4x128xi32>
    %c1_i32 = arith.constant 1 : i32
    %4 = vector.broadcast %c1_i32 : i32 to vector<1x4x128xi32>
    %5 = arith.cmpi sge, %3, %4 : vector<1x4x128xi32>
    %cst = arith.constant 0xFF800000 : f32
    %6 = vector.broadcast %cst : f32 to vector<1x4x128xf32>
    %7 = arith.select %5, %0, %6 : vector<1x4x128xi1>, vector<1x4x128xf32>
    %cst_2 = arith.constant dense<0xFF800000> : vector<1x128xf32>
    %8 = vector.multi_reduction <maximumf>, %7, %cst_2 [1] : vector<1x4x128xf32> to vector<1x128xf32>
    %c0_3 = arith.constant 0 : index
    %c0_4 = arith.constant 0 : index
    %c0_5 = arith.constant 0 : index
    %9 = vector.load %arg3[%c0_3, %c0_4, %c0_5] : memref<1x1x128xf32, #tpu.memory_space<vmem>>, vector<1x1x128xf32>
    %10 = vector.shape_cast %9 : vector<1x1x128xf32> to vector<1x128xf32>
    %cst_6 = arith.constant 5.000000e-01 : f32
    %11 = vector.broadcast %cst_6 : f32 to vector<1x128xf32>
    %12 = arith.cmpf olt, %10, %11 : vector<1x128xf32>
    %13 = arith.subf %8, %2 : vector<1x128xf32>
    %cst_7 = arith.constant 0.000000e+00 : f32
    %14 = vector.broadcast %cst_7 : f32 to vector<1x128xf32>
    %15 = arith.maximumf %13, %14 : vector<1x128xf32>
    %16 = math.absf %13 : vector<1x128xf32>
    %cst_8 = arith.constant 0.000000e+00 : f32
    %17 = vector.broadcast %cst_8 : f32 to vector<1x128xf32>
    %18 = arith.subf %17, %16 : vector<1x128xf32>
    %19 = math.exp %18 : vector<1x128xf32>
    %20 = math.log1p %19 : vector<1x128xf32>
    %21 = arith.addf %15, %20 : vector<1x128xf32>
    %cst_9 = arith.constant 0.000000e+00 : f32
    %22 = vector.broadcast %cst_9 : f32 to vector<1x128xf32>
    %23 = arith.select %12, %13, %22 : vector<1x128xi1>, vector<1x128xf32>
    %24 = arith.subf %21, %23 : vector<1x128xf32>
    %c0_10 = arith.constant 0 : index
    %c0_11 = arith.constant 0 : index
    %c0_12 = arith.constant 0 : index
    %25 = vector.load %arg4[%c0_10, %c0_11, %c0_12] : memref<1x1x128xf32, #tpu.memory_space<vmem>>, vector<1x1x128xf32>
    %26 = vector.shape_cast %25 : vector<1x1x128xf32> to vector<1x128xf32>
    %27 = arith.mulf %24, %26 : vector<1x128xf32>
    %cst_13 = arith.constant dense<0.000000e+00> : vector<1xf32>
    %28 = vector.multi_reduction <add>, %27, %cst_13 [1] : vector<1x128xf32> to vector<1xf32>
    %29 = vector.shape_cast %28 : vector<1xf32> to vector<1x1xf32>
    %30 = vector.shape_cast %29 : vector<1x1xf32> to vector<1x1x1xf32>
    %c0_14 = arith.constant 0 : index
    %c0_15 = arith.constant 0 : index
    %c0_16 = arith.constant 0 : index
    %31 = vector.load %arg5[%c0_14, %c0_15, %c0_16] : memref<1x1x1xf32, #tpu.memory_space<vmem>>, vector<1x1x1xf32>
    tpu.vector_store %arg5[%c0_14, %c0_15, %c0_16], %30 {strides = array<i32>} : memref<1x1x1xf32, #tpu.memory_space<vmem>>, vector<1x1x1xf32>,
    return
  }
  func.func @transform_0(%arg0: i32, %arg1: i32) -> (i32, i32, i32) {
    %c0_i32 = arith.constant 0 : i32
    %c0_i32_0 = arith.constant 0 : i32
    return %arg0, %c0_i32, %arg1 : i32, i32, i32
  }
  func.func @transform_1(%arg0: i32, %arg1: i32) -> (i32, i32, i32) {
    %c0_i32 = arith.constant 0 : i32
    %c0_i32_0 = arith.constant 0 : i32
    return %arg0, %c0_i32, %arg1 : i32, i32, i32
  }
  func.func @transform_2(%arg0: i32, %arg1: i32) -> (i32, i32, i32) {
    %c0_i32 = arith.constant 0 : i32
    %c0_i32_0 = arith.constant 0 : i32
    return %arg0, %c0_i32, %arg1 : i32, i32, i32
  }
  func.func @transform_3(%arg0: i32, %arg1: i32) -> (i32, i32, i32) {
    %c2_i32 = arith.constant 2 : i32
    %0 = arith.muli %arg0, %c2_i32 : i32
    %1 = arith.addi %0, %arg1 : i32
    %c0_i32 = arith.constant 0 : i32
    %c0_i32_0 = arith.constant 0 : i32
    %c0_i32_1 = arith.constant 0 : i32
    return %1, %c0_i32, %c0_i32_0 : i32, i32, i32
  }
}

</mosaic_0001>

<llo_original>
// kernel: tpu_custom_call.1
$region0: #{tpu_custom_call.1}
  #allocation0 [shape = 'u32[]', space=smem, size = 0x4, offset = 0x4, fixed_abs, tag = 'smem constant byte address 0x4 - core index']
  #allocation1 [shape = 'u32[144,128]{1,0:T(1,128)}', space=vmem, size = 0x12000, scoped, tag = 'internal scratch']
  %s0 = inlined_call_operand.hbm [shape: f32[2,4,256], index: 0, kind: input, shape index: {}]
  %s1 = inlined_call_operand.hbm [shape: f32[2,1,256], index: 1, kind: input, shape index: {}]
  %s2 = inlined_call_operand.hbm [shape: f32[2,1,256], index: 2, kind: input, shape index: {}]
  %s3 = inlined_call_operand.vmem [shape: f32[4,1,1], index: 3, kind: output, shape index: {}]
  %s4 = sld [smem:[#allocation0]]
  $region57: #{tpu_custom_call.1} parent=0
    _
  %s6 = ssub.s32 1, %s4
  %s7 = scalar_select 0, %s6, %s4
  $region1: #{tpu_custom_call.1} parent=0
    #allocation2 [shape = 'u8[4096]{0}', space=vmem, size = 0x1000, scoped, tag = 'input window, operand 0']
    #allocation3 [shape = 's32[2]{0}', space=sflag, size = 0x8, scoped, tag = 'scoped memory for tpu_custom_call.1']
    #allocation4 [shape = 'u8[1024]{0}', space=vmem, size = 0x400, scoped, tag = 'input window, operand 1']
    #allocation5 [shape = 's32[2]{0}', space=sflag, size = 0x8, scoped, tag = 'scoped memory for tpu_custom_call.1']
    #allocation6 [shape = 'u8[1024]{0}', space=vmem, size = 0x400, scoped, tag = 'input window, operand 2']
    %8 = vsyncpa [#allocation3], 0
    %s9 = scalar_lea.sflag [#allocation3], 1
    %10 = vsyncpa %s9, 0
    %11 = vsyncpa [#allocation5], 0
    %s12 = scalar_lea.sflag [#allocation5], 1
    %13 = vsyncpa %s12, 0
    loop: start=0, step=1, limit=6
    $region2: #{tpu_custom_call.1} parent=1 // loop_pre_header
      _
    $region3: #{tpu_custom_call.1} parent=1 // loop_header
      %s15 = sphi 0, %s19
      %p16 = scmp.ge.s32.totalorder %s15, 6
      %s22 = sphi 0, %s34
      %s23 = sphi 0, %s30
      %s24 = sphi 0, %s22
      %s25 = sphi 0, %s23
      %s26 = sphi 0, %s24
      %s27 = sphi 0, %s25
      %s39 = sphi 0, %s41
      %s42 = sphi 0, %s39
      %s43 = sphi 0, %s42
      %s59 = sphi 0, %s43
      %s67 = sphi 0, %s69
      %s70 = sphi 0, %s67
      %s71 = sphi 0, %s70
      %s87 = sphi 0, %s71
      %s95 = sphi 0, %s97
      %s98 = sphi 0, %s95
      %s99 = sphi 0, %s98
      %s115 = sphi 0, %s99
      %s125 = sphi 0, %s127
      %s128 = sphi 0, %s125
      %s129 = sphi 0, %s128
      %s145 = sphi 0, %s129
    $region4: #{tpu_custom_call.1} parent=1 // loop_header_branch
      %18 = sbr.rel (%p16) target = $region8
    $region5: #{tpu_custom_call.1} parent=1 // loop_body
      %s20 = ssub.s32 %s15, 1
      %s21 = ssub.s32 %s15, 2
      %s28 = sadd.s32 1, %s23
      %p29 = scmp.ge.s32.totalorder %s28, 2
      %s30 = scalar_select %p29, 0, %s28
      %s31 = sadd.s32 1, %s22
      %s32 = scalar_select %p29, %s31, %s22
      %p33 = scmp.ge.s32.totalorder %s32, 2
      %s34 = scalar_select %p33, 0, %s32
      %s35 = ssub.s32 %s22, %s34
      %s36 = ssub.s32 %s23, %s30
      %s37 = sor.u32 %s35, %s36
      %p38 = scmp.eq.s32.totalorder %s37, 0
      %s40 = sadd.s32 %s39, 1
      %s41 = scalar_select %p38, %s39, %s40
      %p44 = pneg %p38
      %p45 = scmp.eq.s32.totalorder %s15, 3
      %p46 = por %p44, %p45
      %p47 = scmp.ne.s32.totalorder %s39, %s42
      %p48 = scmp.eq.s32.totalorder %s15, 0
      %p49 = por %p47, %p48
      %p50 = scmp.ne.s32.totalorder %s39, %s42
      %p51 = scmp.eq.s32.totalorder %s20, 3
      %p52 = por %p50, %p51
      %p53 = scmp.ne.s32.totalorder %s42, %s43
      %p54 = scmp.eq.s32.totalorder %s20, 0
      %p55 = por %p53, %p54
      %p56 = scmp.ne.s32.totalorder %s42, %s43
      %p57 = scmp.eq.s32.totalorder %s21, 3
      %p58 = por %p56, %p57
      %p60 = scmp.ne.s32.totalorder %s43, %s59
      %p61 = scmp.eq.s32.totalorder %s21, 0
      %p62 = por %p60, %p61
      %s63 = ssub.s32 %s22, %s34
      %s64 = ssub.s32 %s23, %s30
      %s65 = sor.u32 %s63, %s64
      %p66 = scmp.eq.s32.totalorder %s65, 0
      %s68 = sadd.s32 %s67, 1
      %s69 = scalar_select %p66, %s67, %s68
      %p72 = pneg %p66
      %p73 = scmp.eq.s32.totalorder %s15, 3
      %p74 = por %p72, %p73
      %p75 = scmp.ne.s32.totalorder %s67, %s70
      %p76 = scmp.eq.s32.totalorder %s15, 0
      %p77 = por %p75, %p76
      %p78 = scmp.ne.s32.totalorder %s67, %s70
      %p79 = scmp.eq.s32.totalorder %s20, 3
      %p80 = por %p78, %p79
      %p81 = scmp.ne.s32.totalorder %s70, %s71
      %p82 = scmp.eq.s32.totalorder %s20, 0
      %p83 = por %p81, %p82
      %p84 = scmp.ne.s32.totalorder %s70, %s71
      %p85 = scmp.eq.s32.totalorder %s21, 3
      %p86 = por %p84, %p85
      %p88 = scmp.ne.s32.totalorder %s71, %s87
      %p89 = scmp.eq.s32.totalorder %s21, 0
      %p90 = por %p88, %p89
      %s91 = ssub.s32 %s22, %s34
      %s92 = ssub.s32 %s23, %s30
      %s93 = sor.u32 %s91, %s92
      %p94 = scmp.eq.s32.totalorder %s93, 0
      %s96 = sadd.s32 %s95, 1
      %s97 = scalar_select %p94, %s95, %s96
      %p100 = pneg %p94
      %p101 = scmp.eq.s32.totalorder %s15, 3
      %p102 = por %p100, %p101
      %p103 = scmp.ne.s32.totalorder %s95, %s98
      %p104 = scmp.eq.s32.totalorder %s15, 0
      %p105 = por %p103, %p104
      %p106 = scmp.ne.s32.totalorder %s95, %s98
      %p107 = scmp.eq.s32.totalorder %s20, 3
      %p108 = por %p106, %p107
      %p109 = scmp.ne.s32.totalorder %s98, %s99
      %p110 = scmp.eq.s32.totalorder %s20, 0
      %p111 = por %p109, %p110
      %p112 = scmp.ne.s32.totalorder %s98, %s99
      %p113 = scmp.eq.s32.totalorder %s21, 3
      %p114 = por %p112, %p113
      %p116 = scmp.ne.s32.totalorder %s99, %s115
      %p117 = scmp.eq.s32.totalorder %s21, 0
      %p118 = por %p116, %p117
      %s119 = smul.u32 %s22, 2
      %s120 = sadd.s32 %s119, %s23
      %s121 = smul.u32 %s34, 2
      %s122 = sadd.s32 %s121, %s30
      %s123 = ssub.s32 %s120, %s122
      %p124 = scmp.eq.s32.totalorder %s123, 0
      %s126 = sadd.s32 %s125, 1
      %s127 = scalar_select %p124, %s125, %s126
      %p130 = pneg %p124
      %p131 = scmp.eq.s32.totalorder %s15, 3
      %p132 = por %p130, %p131
      %p133 = scmp.ne.s32.totalorder %s125, %s128
      %p134 = scmp.eq.s32.totalorder %s15, 0
      %p135 = por %p133, %p134
      %p136 = scmp.ne.s32.totalorder %s125, %s128
      %p137 = scmp.eq.s32.totalorder %s20, 3
      %p138 = por %p136, %p137
      %p139 = scmp.ne.s32.totalorder %s128, %s129
      %p140 = scmp.eq.s32.totalorder %s20, 0
      %p141 = por %p139, %p140
      %p142 = scmp.ne.s32.totalorder %s128, %s129
      %p143 = scmp.eq.s32.totalorder %s21, 3
      %p144 = por %p142, %p143
      %p146 = scmp.ne.s32.totalorder %s129, %s145
      %p147 = scmp.eq.s32.totalorder %s21, 0
      %p148 = por %p146, %p147
      %p149 = scmp.le.s32.totalorder 1, %s15
      %p150 = scmp.lt.s32.totalorder %s15, 5
      %p151 = pnand %p149, %p150
      %p152 = pneg %p151
      // Predicated region
      $region9: #{tpu_custom_call.1} parent=5 // pred_check
        _
      $region10: #{tpu_custom_call.1} parent=5 // pred_check_branch
        %154 = sbr.rel (%p151) target = $region12
      $region11: #{tpu_custom_call.1} parent=5 // pred_region
        %s155 = ssub.s32 %s15, 1
      $region12: #{tpu_custom_call.1} parent=5 // pred_fallthru
        _
      %p156 = scmp.lt.s32.totalorder %s15, 4
      // Predicated region
      $region13: #{tpu_custom_call.1} parent=5 // pred_check
        %p157 = pneg %p156
      $region14: #{tpu_custom_call.1} parent=5 // pred_check_branch
        %159 = sbr.rel (%p157) target = $region16
      $region15: #{tpu_custom_call.1} parent=5 // pred_region
        // Predicated region
        $region17: #{tpu_custom_call.1} parent=15 // pred_check
          %p160 = pneg %p49
        $region18: #{tpu_custom_call.1} parent=15 // pred_check_branch
          %162 = sbr.rel (%p160) target = $region20
        $region19: #{tpu_custom_call.1} parent=15 // pred_region
          %s163 = sand.u32 %s39, 1
          %s164 = scalar_lea.sflag [#allocation3], %s163
          %s165 = sand.u32 %s39, 1
          %s166 = smul.addr %s165, 4
          %s167 = scalar_lea.vmem [#allocation2], %s166
          %s169 = ssub.s32 64, 64
          %170 = vsyncadd %s164, %s169
          %s171 = smul.addr %s22, 2
          %s172 = sadd.s32 %s23, %s171
          %s173 = smul.addr %s172, 64
          %s174 = scalar_lea.hbm %s0, %s173
          %s176 = sshll.u32 %s167, 4
          %s177 = int_to_ptr.vmem [resolvable:$true] %s176
          %179 = dma.hbm_to_vmem [thread:$0]  %s174, 64, %s177, %s164
        $region20: #{tpu_custom_call.1} parent=15 // pred_fallthru
          _
        // Predicated region
        $region21: #{tpu_custom_call.1} parent=15 // pred_check
          %p180 = pneg %p77
        $region22: #{tpu_custom_call.1} parent=15 // pred_check_branch
          %182 = sbr.rel (%p180) target = $region24
        $region23: #{tpu_custom_call.1} parent=15 // pred_region
          %s183 = sand.u32 %s15, 1
          %s184 = scalar_lea.sflag [#allocation5], %s183
          %s185 = sand.u32 %s67, 1
          %s186 = scalar_lea.vmem [#allocation4], %s185
          %s188 = ssub.s32 16, 16
          %189 = vsyncadd %s184, %s188
          %s190 = smul.addr %s22, 2
          %s191 = sadd.s32 %s23, %s190
          %s192 = smul.addr %s191, 16
          %s193 = scalar_lea.hbm %s1, %s192
          %s195 = sshll.u32 %s186, 4
          %s196 = int_to_ptr.vmem [resolvable:$true] %s195
          %198 = dma.hbm_to_vmem [thread:$0]  %s193, 16, %s196, %s184
        $region24: #{tpu_custom_call.1} parent=15 // pred_fallthru
          _
        // Predicated region
        $region25: #{tpu_custom_call.1} parent=15 // pred_check
          %p199 = pneg %p105
        $region26: #{tpu_custom_call.1} parent=15 // pred_check_branch
          %201 = sbr.rel (%p199) target = $region28
        $region27: #{tpu_custom_call.1} parent=15 // pred_region
          %s202 = sand.u32 %s15, 1
          %s203 = scalar_lea.sflag [#allocation5], %s202
          %s204 = sand.u32 %s95, 1
          %s205 = scalar_lea.vmem [#allocation6], %s204
          %s207 = ssub.s32 16, 16
          %208 = vsyncadd %s203, %s207
          %s209 = smul.addr %s22, 2
          %s210 = sadd.s32 %s23, %s209
          %s211 = smul.addr %s210, 16
          %s212 = scalar_lea.hbm %s2, %s211
          %s214 = sshll.u32 %s205, 4
          %s215 = int_to_ptr.vmem [resolvable:$true] %s214
          %217 = dma.hbm_to_vmem [thread:$0]  %s212, 16, %s215, %s203
        $region28: #{tpu_custom_call.1} parent=15 // pred_fallthru
          _
      $region16: #{tpu_custom_call.1} parent=5 // pred_fallthru
        _
      %p218 = scmp.le.s32.totalorder 1, %s15
      %p219 = scmp.lt.s32.totalorder %s15, 5
      %p220 = pnand %p218, %p219
      %p221 = pneg %p220
      // Predicated region
      $region29: #{tpu_custom_call.1} parent=5 // pred_check
        _
      $region30: #{tpu_custom_call.1} parent=5 // pred_check_branch
        %223 = sbr.rel (%p220) target = $region32
      $region31: #{tpu_custom_call.1} parent=5 // pred_region
        %s224 = ssub.s32 %s15, 1
        %s225 = sand.u32 %s42, 1
        %s226 = scalar_lea.sflag [#allocation3], %s225
        %s227 = sand.u32 %s42, 1
        %s228 = smul.addr %s227, 4
        %s229 = scalar_lea.vmem [#allocation2], %s228
        // Predicated region
        $region33: #{tpu_custom_call.1} parent=31 // pred_check
          %p230 = pneg %p55
        $region34: #{tpu_custom_call.1} parent=31 // pred_check_branch
          %232 = sbr.rel (%p230) target = $region36
        $region35: #{tpu_custom_call.1} parent=31 // pred_region
          %233 = dma.done %s226, 64
        $region36: #{tpu_custom_call.1} parent=31 // pred_fallthru
          _
        %s234 = sand.u32 %s20, 1
        %s235 = scalar_lea.sflag [#allocation5], %s234
        %s236 = sand.u32 %s70, 1
        %s237 = scalar_lea.vmem [#allocation4], %s236
        // Predicated region
        $region37: #{tpu_custom_call.1} parent=31 // pred_check
          %p238 = pneg %p83
        $region38: #{tpu_custom_call.1} parent=31 // pred_check_branch
          %240 = sbr.rel (%p238) target = $region40
        $region39: #{tpu_custom_call.1} parent=31 // pred_region
          %241 = dma.done %s235, 16
        $region40: #{tpu_custom_call.1} parent=31 // pred_fallthru
          _
        %s242 = sand.u32 %s20, 1
        %s243 = scalar_lea.sflag [#allocation5], %s242
        %s244 = sand.u32 %s98, 1
        %s245 = scalar_lea.vmem [#allocation6], %s244
        // Predicated region
        $region41: #{tpu_custom_call.1} parent=31 // pred_check
          %p246 = pneg %p111
        $region42: #{tpu_custom_call.1} parent=31 // pred_check_branch
          %248 = sbr.rel (%p246) target = $region44
        $region43: #{tpu_custom_call.1} parent=31 // pred_region
          %249 = dma.done %s243, 16
        $region44: #{tpu_custom_call.1} parent=31 // pred_fallthru
          _
        %s250 = sand.u32 %s42, 1
        %s251 = scalar_lea.sflag [#allocation3], %s250
        %s252 = sand.u32 %s42, 1
        %s253 = smul.addr %s252, 4
        %s254 = scalar_lea.vmem [#allocation2], %s253
        %p255 = pneg %p55
        %p256 = pneg %p52
        %s257 = sand.u32 %s20, 1
        %s258 = scalar_lea.sflag [#allocation5], %s257
        %s259 = sand.u32 %s70, 1
        %s260 = scalar_lea.vmem [#allocation4], %s259
        %p261 = pneg %p83
        %p262 = pneg %p80
        %s263 = sand.u32 %s20, 1
        %s264 = scalar_lea.sflag [#allocation5], %s263
        %s265 = sand.u32 %s98, 1
        %s266 = scalar_lea.vmem [#allocation6], %s265
        %p267 = pneg %p111
        %p268 = pneg %p108
        %p269 = pneg %p141
        %p270 = pneg %p138
        %s271 = smul.u32 %s24, 2
        %s272 = sadd.s32 %s271, %s25
        %p273 = scmp.lt.s32.totalorder %s272, 3
        %s274 = scalar_select %p273, %s272, 3
        %s275 = scalar_lea.vmem %s3, %s274
        %s276 = smul.u32 %s24, 2
        %s277 = sadd.s32 %s276, %s25
        %p278 = scmp.lt.s32.totalorder %s277, 3
        %s279 = scalar_select %p278, %s277, 3
        %s280 = scalar_lea.vmem %s3, %s279
        %s281 = smul.u32 %s24, 2
        %s282 = sadd.s32 %s281, %s25
        %v283 = vld [vmem:[%s229] sm:$0xf]
        %v284 = vlaneseq
        %v285 = vshrl.u32 %v284, 7
        %vm286 = vcmp.ge.s32.totalorder %v285, 1
        %v287 = vsel %vm286, %v283, -inf
        %vm288 = vcmask 1043456
        %v289 = vsel %vm288, %v287, -inf
        %v290 = vrot.slane %v289, 4
        %v291 = vmax.f32 %v289, %v290
        %v292 = vrot.slane %v291, 2
        %v293 = vmax.f32 %v291, %v292
        %v294 = vrot.slane %v293, 1
        %v295 = vmax.f32 %v293, %v294
        %v296 = vld [vmem:[%s237] sm:$0x1]
        %vm297 = vcmp.lt.f32.partialorder %v296, 0.5
        %v298 = vsub.f32 %v295, %v283
        %v299 = vmax.f32 %v298, 0.0
        %v300 = vand.u32 2147483647, %v298
        %v301 = vsub.f32 0.0, %v300
        %v302 = vmul.f32 %v301, 1.442695
        %v303 = vpow.pop %v302
        %v304 = vadd.f32 %v303, 1.0
        %v305 = vlog2.pop %v304
        %v306 = vmul.f32 %v305, 0.6931472
        %v307 = vmul.f32 -0.5, %v303
        %v308 = vadd.f32 %v307, 1.0
        %v309 = vmul.f32 %v308, %v303
        %v310 = vand.u32 2147483647, %v303
        %vm311 = vcmp.lt.f32.partialorder %v310, 0.0004427343
        %v312 = vsel %vm311, %v309, %v306
        %v313 = vadd.f32 %v299, %v312
        %v314 = vsel %vm297, %v298, 0.0
        %v315 = vsub.f32 %v313, %v314
        %v316 = vld [vmem:[%s245] sm:$0x1]
        %v317 = vmul.f32 %v315, %v316
        %vm318 = vcmask 1040384
        %v319 = vsel %vm318, %v317, 0.0
        %320 = vadd.xlane.f32.xlu0 %v319
        %v321 = vpop.xlane.xlu0 %320
        %vm322 = vcmask 0
        %323 = vst.msk [vmem:[%s280] sm:$0x1] %vm322, %v321
        %s324 = smul.u32 %s24, 2
        %s325 = sadd.s32 %s324, %s25
        %p326 = scmp.lt.s32.totalorder %s325, 3
        %s327 = scalar_select %p326, %s325, 3
        %s328 = scalar_lea.vmem %s3, %s327
        // Predicated region
        $region45: #{tpu_custom_call.1} parent=31 // pred_check
          %p329 = pneg %p138
        $region46: #{tpu_custom_call.1} parent=31 // pred_check_branch
          %331 = sbr.rel (%p329) target = $region48
        $region47: #{tpu_custom_call.1} parent=31 // pred_region
          %s332 = smul.u32 %s24, 2
          %s333 = sadd.s32 %s332, %s25
        $region48: #{tpu_custom_call.1} parent=31 // pred_fallthru
          _
      $region32: #{tpu_custom_call.1} parent=5 // pred_fallthru
        _
      %p334 = scmp.le.s32.totalorder 2, %s15
      // Predicated region
      $region49: #{tpu_custom_call.1} parent=5 // pred_check
        %p335 = pneg %p334
      $region50: #{tpu_custom_call.1} parent=5 // pred_check_branch
        %337 = sbr.rel (%p335) target = $region52
      $region51: #{tpu_custom_call.1} parent=5 // pred_region
        %s338 = ssub.s32 %s15, 2
        // Predicated region
        $region53: #{tpu_custom_call.1} parent=51 // pred_check
          %p339 = pneg %p144
        $region54: #{tpu_custom_call.1} parent=51 // pred_check_branch
          %341 = sbr.rel (%p339) target = $region56
        $region55: #{tpu_custom_call.1} parent=51 // pred_region
          %s342 = smul.u32 %s26, 2
          %s343 = sadd.s32 %s342, %s27
          %p344 = scmp.lt.s32.totalorder %s343, 3
          %s345 = scalar_select %p344, %s343, 3
          %s346 = scalar_lea.vmem %s3, %s345
        $region56: #{tpu_custom_call.1} parent=51 // pred_fallthru
          _
      $region52: #{tpu_custom_call.1} parent=5 // pred_fallthru
        _
    $region6: #{tpu_custom_call.1} parent=1 // loop_footer
      %s19 = sadd.s32 1, %s15
    $region7: #{tpu_custom_call.1} parent=1 // loop_footer_branch
      %14 = sbr.rel target = $region3
    $region8: #{tpu_custom_call.1} parent=1 // loop_exit
      _
    %347 = vsyncpa [#allocation3], 1
    %s348 = scalar_lea.sflag [#allocation3], 1
    %349 = vsyncpa %s348, 1
    %350 = vsyncpa [#allocation5], 1
    %s351 = scalar_lea.sflag [#allocation5], 1
    %352 = vsyncpa %s351, 1

</llo_original>
